<compile_context>
chip_gen: v5e
topology: v5e:2x2
jax: 0.10.0
libtpu: 0.0.40
codegen_flags: <defaults>
</compile_context>

<pallas_src>
import math
import jax
import jax.numpy as jnp
from jax.experimental import pallas as pl
from jax.experimental.pallas import tpu as pltpu

LANE = 128      # f32 lane width
SUBLANE = 8     # f32 sublane height


def _round_up(x, m):
    return (x + m - 1) // m * m


def dqn_kernel(x_ref, w1_ref, b1_ref, w2_ref, b2_ref, w3_ref, b3_ref, o_ref):
    # One batch tile per grid step. Weights/biases are full-array resident blocks
    # (constant index_map -> DMA'd from HBM once, reused for every step).  Three
    # MXU matmuls with f32 accumulation, fused with f32 bias-add + ReLU so the
    # intermediates never leave VMEM.
    x = x_ref[...].astype(w1_ref.dtype)          # cast to matmul dtype in-kernel
    h1 = jnp.dot(x, w1_ref[...], preferred_element_type=jnp.float32) + b1_ref[...]
    h1 = jnp.maximum(h1, 0.0)
    h2 = jnp.dot(h1.astype(w2_ref.dtype), w2_ref[...],
                 preferred_element_type=jnp.float32) + b2_ref[...]
    h2 = jnp.maximum(h2, 0.0)
    out = jnp.dot(h2.astype(w3_ref.dtype), w3_ref[...],
                  preferred_element_type=jnp.float32) + b3_ref[...]
    o_ref[...] = out.astype(o_ref.dtype)


def prepare_dqn_params(params, *, use_bf16=True):
    """One-time (init-time) prep: zero-pad the final layer to 128 output lanes so
    the kernel's output store is lane-dense (unmasked vst), and pre-cast the
    matmul operands to bf16.  Doing this here instead of per-forward removes ~6
    tiny pad/cast XLA kernels from the hot path."""
    w1, b1, w2, b2, w3, b3 = params
    out_size = w3.shape[1]
    out_p = _round_up(out_size, LANE)
    if out_p != out_size:
        w3 = jnp.pad(w3, ((0, 0), (0, out_p - out_size)))   # zero columns
        b3 = jnp.pad(b3, ((0, 0), (0, out_p - out_size)))
    mat_dtype = jnp.bfloat16 if use_bf16 else jnp.float32
    prepared = (w1.astype(mat_dtype), b1.astype(jnp.float32),
                w2.astype(mat_dtype), b2.astype(jnp.float32),
                w3.astype(mat_dtype), b3.astype(jnp.float32))
    return prepared, out_size


def dqn_forward(x, prepared_params, out_size, *, tile_b=2048, out_dtype=jnp.float32):
    """Fused 3-layer MLP forward. Returns (batch, out_size) Q-values."""
    w1, b1, w2, b2, w3, b3 = prepared_params
    batch, in_size = x.shape
    hidden = w1.shape[1]
    out_p = w3.shape[1]

    # --- batch tiling --------------------------------------------------------
    # Balanced tiles: split the batch into n roughly-equal tiles (rounded to the
    # 8-row sublane) instead of padding up to the next multiple of a fixed tile.
    # For large batches that fit one tile, still use 2 grid steps so v7x's two
    # TensorCores both get work.
    n_tiles = max(1, -(-batch // tile_b))
    if n_tiles == 1 and batch >= 1024:
        n_tiles = 2
    if n_tiles == 1:
        tile, batch_p = batch, batch                 # full-array block, no pad
    else:
        tile = _round_up(-(-batch // n_tiles), SUBLANE)
        batch_p = tile * n_tiles
    if batch_p != batch:
        x = jnp.pad(x, ((0, batch_p - batch), (0, 0)))

    wbytes = jnp.dtype(w1.dtype).itemsize
    obytes = jnp.dtype(out_dtype).itemsize
    xbytes = jnp.dtype(x.dtype).itemsize
    cost = pl.CostEstimate(
        flops=2 * batch_p * (in_size * hidden + hidden * hidden + hidden * out_p),
        transcendentals=0,
        bytes_accessed=(batch_p * in_size * xbytes                 # x in
                        + batch_p * out_p * obytes                 # out
                        + (in_size * hidden + hidden * hidden + hidden * out_p) * wbytes
                        + (2 * hidden + out_p) * 4),               # biases
    )

    # --- VMEM budget: only bind the scoped limit when fat tiles need it ------
    vmem_est = (2 * tile * in_size * xbytes                        # x (2 bufs)
                + 2 * tile * out_p * obytes                        # out (2 bufs)
                + 2 * (in_size + hidden + out_p) * hidden * wbytes # weights
                + 2 * (2 * hidden + out_p) * 4                     # biases
                + 3 * tile * max(hidden, out_p) * 4)               # h1/h2/out f32
    cparams = dict(dimension_semantics=("parallel",))
    if vmem_est > (24 << 20):
        cparams["vmem_limit_bytes"] = min(int(vmem_est * 3 // 2) + (4 << 20), 120 << 20)

    def resident(a):
        # Full-array block with constant block index: fetched from HBM once and
        # kept VMEM-resident across all batch tiles (Pallas skips the re-DMA
        # when the block index is unchanged; weights total ~100 KB so the
        # double-buffer allocation is negligible).
        return pl.BlockSpec(a.shape, lambda i: (0,) * a.ndim)

    out = pl.pallas_call(
        dqn_kernel,
        out_shape=jax.ShapeDtypeStruct((batch_p, out_p), out_dtype),
        grid=(n_tiles,),
        in_specs=[
            pl.BlockSpec((tile, in_size), lambda i: (i, 0)),       # x: batch-tiled
            resident(w1), resident(b1),
            resident(w2), resident(b2),
            resident(w3), resident(b3),
        ],
        out_specs=pl.BlockSpec((tile, out_p), lambda i: (i, 0)),
        compiler_params=pltpu.CompilerParams(**cparams),
        cost_estimate=cost,
    )(x, w1, b1, w2, b2, w3, b3)

    # TODO(synk): for DQN training, fuse the downstream max_a Q / Q(s, a) gather
    # into the kernel as a small extra output instead of materializing and then
    # slicing the padded (batch_p, 128) Q matrix.
    return out[:batch, :out_size]


def init_dqn_params(key, input_size, output_size, hidden_size=128):
    """Matches the PyTorch module: xavier_uniform_ weights, default nn.Linear
    uniform(-1/sqrt(fan_in), 1/sqrt(fan_in)) biases.  Weights stored (in, out)."""
    keys = jax.random.split(key, 6)

    def xavier(k, fan_in, fan_out):
        bound = math.sqrt(6.0 / (fan_in + fan_out))
        return jax.random.uniform(k, (fan_in, fan_out), jnp.float32,
                                  minval=-bound, maxval=bound)

    def bias(k, fan_in, fan_out):
        bound = 1.0 / math.sqrt(fan_in)
        return jax.random.uniform(k, (1, fan_out), jnp.float32,
                                  minval=-bound, maxval=bound)

    w1 = xavier(keys[0], input_size, hidden_size)
    b1 = bias(keys[1], input_size, hidden_size)
    w2 = xavier(keys[2], hidden_size, hidden_size)
    b2 = bias(keys[3], hidden_size, hidden_size)
    w3 = xavier(keys[4], hidden_size, output_size)
    b3 = bias(keys[5], hidden_size, output_size)
    return (w1, b1, w2, b2, w3, b3)


def reference_forward(x, params, *, use_bf16=True):
    """Pure-JAX reference with the same operand precision as the kernel."""
    w1, b1, w2, b2, w3, b3 = params
    dt = jnp.bfloat16 if use_bf16 else jnp.float32

    def dot(a, w):
        return jnp.dot(a.astype(dt), w.astype(dt),
                       preferred_element_type=jnp.float32)

    h1 = jnp.maximum(dot(x, w1) + b1, 0.0)
    h2 = jnp.maximum(dot(h1, w2) + b2, 0.0)
    return dot(h2, w3) + b3


if __name__ == "__main__":
    key = jax.random.PRNGKey(0)
    k_x, k_x2, k_p = jax.random.split(key, 3)

    batch, input_size, output_size = 2, 8, 4
    x = jax.random.normal(k_x, (batch, input_size), dtype=jnp.float32)
    params = init_dqn_params(k_p, input_size, output_size)

    # f32 path: exact check against the f32 reference (single-tile grid).
    prep_f32, out_size = prepare_dqn_params(params, use_bf16=False)
    out_f32 = jax.block_until_ready(dqn_forward(x, prep_f32, out_size))
    ref_f32 = reference_forward(x, params, use_bf16=False)
    assert out_f32.shape == (batch, output_size)
    assert jnp.allclose(out_f32, ref_f32, atol=1e-5, rtol=1e-5), "f32 mismatch"

    # bf16-operand path (default / performance path), matched-precision reference.
    prep_bf16, _ = prepare_dqn_params(params, use_bf16=True)
    out_bf16 = jax.block_until_ready(dqn_forward(x, prep_bf16, out_size))
    ref_bf16 = reference_forward(x, params, use_bf16=True)
    assert out_bf16.shape == (batch, output_size)
    assert jnp.allclose(out_bf16, ref_bf16, atol=1e-2, rtol=1e-2), "bf16 mismatch"

    # Multi-tile / balanced-padding path (grid > 1, batch not a tile multiple).
    xb = jax.random.normal(k_x2, (300, input_size), dtype=jnp.float32)
    out_b = jax.block_until_ready(dqn_forward(xb, prep_bf16, out_size, tile_b=128))
    ref_b = reference_forward(xb, params, use_bf16=True)
    assert out_b.shape == (300, output_size)
    assert jnp.allclose(out_b, ref_b, atol=1e-2, rtol=1e-2), "tiled bf16 mismatch"

    print("KERNEL_OK")
</pallas_src>

<mosaic_0001>
module attributes {stable_mosaic.version = 11 : i64} {
  func.func @dqn_kernel(%arg0: i32, %arg1: memref<2x8xf32, #tpu.memory_space<vmem>>, %arg2: memref<8x128xf32, #tpu.memory_space<vmem>>, %arg3: memref<1x128xf32, #tpu.memory_space<vmem>>, %arg4: memref<128x128xf32, #tpu.memory_space<vmem>>, %arg5: memref<1x128xf32, #tpu.memory_space<vmem>>, %arg6: memref<128x128xf32, #tpu.memory_space<vmem>>, %arg7: memref<1x128xf32, #tpu.memory_space<vmem>>, %arg8: memref<2x128xf32, #tpu.memory_space<vmem>>) attributes {dimension_semantics = [#tpu.dimension_semantics<parallel>], iteration_bounds = array<i64: 1>, scalar_prefetch = 0 : i64, scratch_operands = 0 : i64, tpu.core_type = #tpu.core_type<tc>, window_params = [{transform_indices = @transform_0, window_bounds = array<i64: 2, 8>}, {pipeline_mode = #tpu.pipeline_mode<synchronous>, transform_indices = @transform_1, window_bounds = array<i64: 8, 128>}, {pipeline_mode = #tpu.pipeline_mode<synchronous>, transform_indices = @transform_2, window_bounds = array<i64: 1, 128>}, {pipeline_mode = #tpu.pipeline_mode<synchronous>, transform_indices = @transform_3, window_bounds = array<i64: 128, 128>}, {pipeline_mode = #tpu.pipeline_mode<synchronous>, transform_indices = @transform_4, window_bounds = array<i64: 1, 128>}, {pipeline_mode = #tpu.pipeline_mode<synchronous>, transform_indices = @transform_5, window_bounds = array<i64: 128, 128>}, {pipeline_mode = #tpu.pipeline_mode<synchronous>, transform_indices = @transform_6, window_bounds = array<i64: 1, 128>}, {transform_indices = @transform_7, window_bounds = array<i64: 2, 128>}]} {
    %c0 = arith.constant 0 : index
    %c0_0 = arith.constant 0 : index
    %0 = vector.load %arg1[%c0, %c0_0] : memref<2x8xf32, #tpu.memory_space<vmem>>, vector<2x8xf32>
    %c0_1 = arith.constant 0 : index
    %c0_2 = arith.constant 0 : index
    %1 = vector.load %arg2[%c0_1, %c0_2] : memref<8x128xf32, #tpu.memory_space<vmem>>, vector<8x128xf32>
    %cst = arith.constant dense<0.000000e+00> : vector<2x128xf32>
    %2 = tpu.matmul %0, %1, %cst {dimension_numbers = #tpu.dot_dimension_numbers<[1], [0], [0], [1], [0, 0, 1, 1], [], []>} : vector<2x8xf32>, vector<8x128xf32>, vector<2x128xf32> -> vector<2x128xf32>
    %c0_3 = arith.constant 0 : index
    %c0_4 = arith.constant 0 : index
    %3 = vector.load %arg3[%c0_3, %c0_4] : memref<1x128xf32, #tpu.memory_space<vmem>>, vector<1x128xf32>
    %4 = vector.broadcast %3 : vector<1x128xf32> to vector<2x128xf32>
    %5 = arith.addf %2, %4 : vector<2x128xf32>
    %cst_5 = arith.constant 0.000000e+00 : f32
    %6 = vector.broadcast %cst_5 : f32 to vector<2x128xf32>
    %7 = arith.maximumf %5, %6 : vector<2x128xf32>
    %c0_6 = arith.constant 0 : index
    %c0_7 = arith.constant 0 : index
    %8 = vector.load %arg4[%c0_6, %c0_7] : memref<128x128xf32, #tpu.memory_space<vmem>>, vector<128x128xf32>
    %cst_8 = arith.constant dense<0.000000e+00> : vector<2x128xf32>
    %9 = tpu.matmul %7, %8, %cst_8 {dimension_numbers = #tpu.dot_dimension_numbers<[1], [0], [0], [1], [0, 0, 1, 1], [], []>} : vector<2x128xf32>, vector<128x128xf32>, vector<2x128xf32> -> vector<2x128xf32>
    %c0_9 = arith.constant 0 : index
    %c0_10 = arith.constant 0 : index
    %10 = vector.load %arg5[%c0_9, %c0_10] : memref<1x128xf32, #tpu.memory_space<vmem>>, vector<1x128xf32>
    %11 = vector.broadcast %10 : vector<1x128xf32> to vector<2x128xf32>
    %12 = arith.addf %9, %11 : vector<2x128xf32>
    %cst_11 = arith.constant 0.000000e+00 : f32
    %13 = vector.broadcast %cst_11 : f32 to vector<2x128xf32>
    %14 = arith.maximumf %12, %13 : vector<2x128xf32>
    %c0_12 = arith.constant 0 : index
    %c0_13 = arith.constant 0 : index
    %15 = vector.load %arg6[%c0_12, %c0_13] : memref<128x128xf32, #tpu.memory_space<vmem>>, vector<128x128xf32>
    %cst_14 = arith.constant dense<0.000000e+00> : vector<2x128xf32>
    %16 = tpu.matmul %14, %15, %cst_14 {dimension_numbers = #tpu.dot_dimension_numbers<[1], [0], [0], [1], [0, 0, 1, 1], [], []>} : vector<2x128xf32>, vector<128x128xf32>, vector<2x128xf32> -> vector<2x128xf32>
    %c0_15 = arith.constant 0 : index
    %c0_16 = arith.constant 0 : index
    %17 = vector.load %arg7[%c0_15, %c0_16] : memref<1x128xf32, #tpu.memory_space<vmem>>, vector<1x128xf32>
    %18 = vector.broadcast %17 : vector<1x128xf32> to vector<2x128xf32>
    %19 = arith.addf %16, %18 : vector<2x128xf32>
    %c0_17 = arith.constant 0 : index
    %c0_18 = arith.constant 0 : index
    %20 = vector.load %arg8[%c0_17, %c0_18] : memref<2x128xf32, #tpu.memory_space<vmem>>, vector<2x128xf32>
    tpu.vector_store %arg8[%c0_17, %c0_18], %19 {strides = array<i32>} : memref<2x128xf32, #tpu.memory_space<vmem>>, vector<2x128xf32>,
    return
  }
  func.func @transform_0(%arg0: i32) -> (i32, i32) {
    %c0_i32 = arith.constant 0 : i32
    %c0_i32_0 = arith.constant 0 : i32
    return %arg0, %c0_i32 : i32, i32
  }
  func.func @transform_1(%arg0: i32) -> (i32, i32) {
    %c0_i32 = arith.constant 0 : i32
    %c0_i32_0 = arith.constant 0 : i32
    %c0_i32_1 = arith.constant 0 : i32
    return %c0_i32, %c0_i32_0 : i32, i32
  }
  func.func @transform_2(%arg0: i32) -> (i32, i32) {
    %c0_i32 = arith.constant 0 : i32
    %c0_i32_0 = arith.constant 0 : i32
    %c0_i32_1 = arith.constant 0 : i32
    return %c0_i32, %c0_i32_0 : i32, i32
  }
  func.func @transform_3(%arg0: i32) -> (i32, i32) {
    %c0_i32 = arith.constant 0 : i32
    %c0_i32_0 = arith.constant 0 : i32
    %c0_i32_1 = arith.constant 0 : i32
    return %c0_i32, %c0_i32_0 : i32, i32
  }
  func.func @transform_4(%arg0: i32) -> (i32, i32) {
    %c0_i32 = arith.constant 0 : i32
    %c0_i32_0 = arith.constant 0 : i32
    %c0_i32_1 = arith.constant 0 : i32
    return %c0_i32, %c0_i32_0 : i32, i32
  }
  func.func @transform_5(%arg0: i32) -> (i32, i32) {
    %c0_i32 = arith.constant 0 : i32
    %c0_i32_0 = arith.constant 0 : i32
    %c0_i32_1 = arith.constant 0 : i32
    return %c0_i32, %c0_i32_0 : i32, i32
  }
  func.func @transform_6(%arg0: i32) -> (i32, i32) {
    %c0_i32 = arith.constant 0 : i32
    %c0_i32_0 = arith.constant 0 : i32
    %c0_i32_1 = arith.constant 0 : i32
    return %c0_i32, %c0_i32_0 : i32, i32
  }
  func.func @transform_7(%arg0: i32) -> (i32, i32) {
    %c0_i32 = arith.constant 0 : i32
    %c0_i32_0 = arith.constant 0 : i32
    return %arg0, %c0_i32 : i32, i32
  }
}

</mosaic_0001>

<llo_original>
// kernel: tpu_custom_call.1
$region0: #{tpu_custom_call.1}
  #allocation0 [shape = 'u32[]', space=smem, size = 0x4, offset = 0x4, fixed_abs, tag = 'smem constant byte address 0x4 - core index']
  #allocation1 [shape = 'u32[72,128]{1,0:T(1,128)}', space=vmem, size = 0x9000, scoped, tag = 'internal scratch']
  %s0 = inlined_call_operand.hbm [shape: f32[2,8], index: 0, kind: input, shape index: {}]
  %s1 = inlined_call_operand.hbm [shape: f32[8,128], index: 1, kind: input, shape index: {}]
  %s2 = inlined_call_operand.vmem [shape: f32[1,128], index: 2, kind: input, shape index: {}]
  %s3 = inlined_call_operand.hbm [shape: f32[128,128], index: 3, kind: input, shape index: {}]
  %s4 = inlined_call_operand.vmem [shape: f32[1,128], index: 4, kind: input, shape index: {}]
  %s5 = inlined_call_operand.hbm [shape: f32[128,128], index: 5, kind: input, shape index: {}]
  %s6 = inlined_call_operand.vmem [shape: f32[1,128], index: 6, kind: input, shape index: {}]
  %s7 = inlined_call_operand.hbm [shape: f32[2,128], index: 7, kind: output, shape index: {}]
  %s8 = sld [smem:[#allocation0]]
  $region54: #{tpu_custom_call.1} parent=0
    _
  %s10 = ssub.s32 1, %s8
  %s11 = scalar_select 0, %s10, %s8
  $region1: #{tpu_custom_call.1} parent=0
    #allocation2 [shape = 'u8[1024]{0}', space=vmem, size = 0x400, scoped, tag = 'input window, operand 0, single buffered']
    #allocation3 [shape = 's32[1]{0}', space=sflag, size = 0x4, scoped, tag = 'scoped memory for tpu_custom_call.1']
    #allocation4 [shape = 's32[1]{0}', space=sflag, size = 0x4, scoped, tag = 'scoped memory for tpu_custom_call.1']
    #allocation5 [shape = 'u8[4096]{0}', space=vmem, size = 0x1000, scoped, tag = 'input window, operand 1, single buffered']
    #allocation6 [shape = 's32[1]{0}', space=sflag, size = 0x4, scoped, tag = 'scoped memory for tpu_custom_call.1']
    #allocation7 [shape = 'u8[65536]{0}', space=vmem, size = 0x10000, scoped, tag = 'input window, operand 3, single buffered']
    #allocation8 [shape = 'u8[65536]{0}', space=vmem, size = 0x10000, scoped, tag = 'input window, operand 5, single buffered']
    #allocation9 [shape = 's32[1]{0}', space=sflag, size = 0x4, scoped, tag = 'scoped memory for tpu_custom_call.1']
    #allocation10 [shape = 'u8[1024]{0}', space=vmem, size = 0x400, scoped, tag = 'output window, operand 0, single buffered']
    %12 = vsyncpa [#allocation3], 0
    %13 = vsyncpa [#allocation6], 0
    %14 = vsyncpa [#allocation9], 0
    %15 = vsyncpa [#allocation4], 0
    // Predicated region
    $region2: #{tpu_custom_call.1} parent=1 // pred_check
      _
    $region3: #{tpu_custom_call.1} parent=1 // pred_check_branch
      %17 = sbr.rel (0) target = $region5
    $region4: #{tpu_custom_call.1} parent=1 // pred_region
      %19 = vsyncadd [#allocation3], 0
      %s21 = sshll.u32 %s0, 4
      %s22 = int_to_ptr.hbm [resolvable:$true] %s21
      %s23 = sshll.u32 [#allocation2], 4
      %s24 = int_to_ptr.vmem [resolvable:$true] %s23
      %26 = dma.hbm_to_vmem [thread:$0]  %s22, 32, %s24, [#allocation3]
    $region5: #{tpu_custom_call.1} parent=1 // pred_fallthru
      _
    // Predicated region
    $region6: #{tpu_custom_call.1} parent=1 // pred_check
      _
    $region7: #{tpu_custom_call.1} parent=1 // pred_check_branch
      %28 = sbr.rel (0) target = $region9
    $region8: #{tpu_custom_call.1} parent=1 // pred_region
      %30 = vsyncadd [#allocation6], 0
      %s32 = sshll.u32 %s1, 4
      %s33 = int_to_ptr.hbm [resolvable:$true] %s32
      %s34 = sshll.u32 [#allocation5], 4
      %s35 = int_to_ptr.vmem [resolvable:$true] %s34
      %37 = dma.hbm_to_vmem [thread:$0]  %s33, 128, %s35, [#allocation6]
    $region9: #{tpu_custom_call.1} parent=1 // pred_fallthru
      _
    // Predicated region
    $region10: #{tpu_custom_call.1} parent=1 // pred_check
      _
    $region11: #{tpu_custom_call.1} parent=1 // pred_check_branch
      %39 = sbr.rel (0) target = $region13
    $region12: #{tpu_custom_call.1} parent=1 // pred_region
      _
    $region13: #{tpu_custom_call.1} parent=1 // pred_fallthru
      _
    // Predicated region
    $region14: #{tpu_custom_call.1} parent=1 // pred_check
      _
    $region15: #{tpu_custom_call.1} parent=1 // pred_check_branch
      %41 = sbr.rel (0) target = $region17
    $region16: #{tpu_custom_call.1} parent=1 // pred_region
      %43 = vsyncadd [#allocation6], 0
      %s44 = sshll.u32 %s3, 4
      %s45 = int_to_ptr.hbm [resolvable:$true] %s44
      %s46 = sshll.u32 [#allocation7], 4
      %s47 = int_to_ptr.vmem [resolvable:$true] %s46
      %52 = dma.hbm_to_vmem [thread:$0]  %s45, 2048, %s47, [#allocation6], 128, 128, 8
    $region17: #{tpu_custom_call.1} parent=1 // pred_fallthru
      _
    // Predicated region
    $region18: #{tpu_custom_call.1} parent=1 // pred_check
      _
    $region19: #{tpu_custom_call.1} parent=1 // pred_check_branch
      %54 = sbr.rel (0) target = $region21
    $region20: #{tpu_custom_call.1} parent=1 // pred_region
      _
    $region21: #{tpu_custom_call.1} parent=1 // pred_fallthru
      _
    // Predicated region
    $region22: #{tpu_custom_call.1} parent=1 // pred_check
      _
    $region23: #{tpu_custom_call.1} parent=1 // pred_check_branch
      %56 = sbr.rel (0) target = $region25
    $region24: #{tpu_custom_call.1} parent=1 // pred_region
      %58 = vsyncadd [#allocation9], 0
      %s59 = sshll.u32 %s5, 4
      %s60 = int_to_ptr.hbm [resolvable:$true] %s59
      %s61 = sshll.u32 [#allocation8], 4
      %s62 = int_to_ptr.vmem [resolvable:$true] %s61
      %67 = dma.hbm_to_vmem [thread:$0]  %s60, 2048, %s62, [#allocation9], 128, 128, 8
    $region25: #{tpu_custom_call.1} parent=1 // pred_fallthru
      _
    // Predicated region
    $region26: #{tpu_custom_call.1} parent=1 // pred_check
      _
    $region27: #{tpu_custom_call.1} parent=1 // pred_check_branch
      %69 = sbr.rel (0) target = $region29
    $region28: #{tpu_custom_call.1} parent=1 // pred_region
      _
    $region29: #{tpu_custom_call.1} parent=1 // pred_fallthru
      _
    // Predicated region
    $region30: #{tpu_custom_call.1} parent=1 // pred_check
      _
    $region31: #{tpu_custom_call.1} parent=1 // pred_check_branch
      %71 = sbr.rel (0) target = $region33
    $region32: #{tpu_custom_call.1} parent=1 // pred_region
      %73 = dma.done [#allocation3], 32
    $region33: #{tpu_custom_call.1} parent=1 // pred_fallthru
      _
    // Predicated region
    $region34: #{tpu_custom_call.1} parent=1 // pred_check
      _
    $region35: #{tpu_custom_call.1} parent=1 // pred_check_branch
      %75 = sbr.rel (0) target = $region37
    $region36: #{tpu_custom_call.1} parent=1 // pred_region
      %77 = dma.done [#allocation6], 128
    $region37: #{tpu_custom_call.1} parent=1 // pred_fallthru
      _
    // Predicated region
    $region38: #{tpu_custom_call.1} parent=1 // pred_check
      _
    $region39: #{tpu_custom_call.1} parent=1 // pred_check_branch
      %79 = sbr.rel (0) target = $region41
    $region40: #{tpu_custom_call.1} parent=1 // pred_region
      %81 = dma.done [#allocation6], 2048
    $region41: #{tpu_custom_call.1} parent=1 // pred_fallthru
      _
    // Predicated region
    $region42: #{tpu_custom_call.1} parent=1 // pred_check
      _
    $region43: #{tpu_custom_call.1} parent=1 // pred_check_branch
      %83 = sbr.rel (0) target = $region45
    $region44: #{tpu_custom_call.1} parent=1 // pred_region
      %85 = dma.done [#allocation9], 2048
    $region45: #{tpu_custom_call.1} parent=1 // pred_fallthru
      _
    %v86 = vld [vmem:[#allocation2] sm:$0x3]
    %v87 = vld [vmem:[#allocation5] sm:$0xff]
    %v88 = vld [vmem:[%s2] sm:$0x1]
    %v90 = vperm.slane %v88, 0
    %vm92 = vcmask 64512
    %v94 = vsel %vm92, %v86, 0
    %96 = vmatpush.msra.mxu0 0.0
    %97 = vmatpush.msra.mxu0 0.0
    %98 = vmatpush.msra.mxu0 0.0
    %99 = vmatpush.msra.mxu0 0.0
    %100 = vmatpush.msra.mxu0 0.0
    %101 = vmatpush.msra.mxu0 0.0
    %102 = vmatpush.msra.mxu0 0.0
    %103 = vmatpush.msra.mxu0 0.0
    %104 = vmatpush.msra.mxu0 0.0
    %105 = vmatpush.msra.mxu0 0.0
    %106 = vmatpush.msra.mxu0 0.0
    %107 = vmatpush.msra.mxu0 0.0
    %108 = vmatpush.msra.mxu0 0.0
    %109 = vmatpush.msra.mxu0 0.0
    %110 = vmatpush.msra.mxu0 0.0
    %111 = vmatpush.msra.mxu0 %v87
    %112 = vmatmul.f32.gmra.mxu0 %v94
    %v113 = vpop.f32.mrf.mxu0
    %v114 = vadd.f32 %v90, %v113
    %115 = vdwg.mxu0
    %v116 = vmax.f32 %v114, 0.0
    %v117 = vld [vmem:[#allocation7] sm:$0xff]
    %v118 = vld [vmem:[#allocation7 + $0x8] sm:$0xff]
    %v119 = vld [vmem:[#allocation7 + $0x10] sm:$0xff]
    %v120 = vld [vmem:[#allocation7 + $0x18] sm:$0xff]
    %v121 = vld [vmem:[#allocation7 + $0x20] sm:$0xff]
    %v122 = vld [vmem:[#allocation7 + $0x28] sm:$0xff]
    %v123 = vld [vmem:[#allocation7 + $0x30] sm:$0xff]
    %v124 = vld [vmem:[#allocation7 + $0x38] sm:$0xff]
    %v125 = vld [vmem:[#allocation7 + $0x40] sm:$0xff]
    %v126 = vld [vmem:[#allocation7 + $0x48] sm:$0xff]
    %v127 = vld [vmem:[#allocation7 + $0x50] sm:$0xff]
    %v128 = vld [vmem:[#allocation7 + $0x58] sm:$0xff]
    %v129 = vld [vmem:[#allocation7 + $0x60] sm:$0xff]
    %v130 = vld [vmem:[#allocation7 + $0x68] sm:$0xff]
    %v131 = vld [vmem:[#allocation7 + $0x70] sm:$0xff]
    %v132 = vld [vmem:[#allocation7 + $0x78] sm:$0xff]
    %v133 = vld [vmem:[%s4] sm:$0x1]
    %v135 = vperm.slane %v133, 0
    %137 = vmatpush.msra.mxu0 %v132
    %138 = vmatpush.msra.mxu0 %v131
    %139 = vmatpush.msra.mxu0 %v130
    %140 = vmatpush.msra.mxu0 %v129
    %141 = vmatpush.msra.mxu0 %v128
    %142 = vmatpush.msra.mxu0 %v127
    %143 = vmatpush.msra.mxu0 %v126
    %144 = vmatpush.msra.mxu0 %v125
    %145 = vmatpush.msra.mxu0 %v124
    %146 = vmatpush.msra.mxu0 %v123
    %147 = vmatpush.msra.mxu0 %v122
    %148 = vmatpush.msra.mxu0 %v121
    %149 = vmatpush.msra.mxu0 %v120
    %150 = vmatpush.msra.mxu0 %v119
    %151 = vmatpush.msra.mxu0 %v118
    %152 = vmatpush.msra.mxu0 %v117
    %153 = vmatmul.f32.gmra.mxu0 %v116
    %v154 = vpop.f32.mrf.mxu0
    %v155 = vadd.f32 %v135, %v154
    %156 = vdwg.mxu0
    %v157 = vmax.f32 %v155, 0.0
    %v158 = vld [vmem:[#allocation8] sm:$0xff]
    %v159 = vld [vmem:[#allocation8 + $0x8] sm:$0xff]
    %v160 = vld [vmem:[#allocation8 + $0x10] sm:$0xff]
    %v161 = vld [vmem:[#allocation8 + $0x18] sm:$0xff]
    %v162 = vld [vmem:[#allocation8 + $0x20] sm:$0xff]
    %v163 = vld [vmem:[#allocation8 + $0x28] sm:$0xff]
    %v164 = vld [vmem:[#allocation8 + $0x30] sm:$0xff]
    %v165 = vld [vmem:[#allocation8 + $0x38] sm:$0xff]
    %v166 = vld [vmem:[#allocation8 + $0x40] sm:$0xff]
    %v167 = vld [vmem:[#allocation8 + $0x48] sm:$0xff]
    %v168 = vld [vmem:[#allocation8 + $0x50] sm:$0xff]
    %v169 = vld [vmem:[#allocation8 + $0x58] sm:$0xff]
    %v170 = vld [vmem:[#allocation8 + $0x60] sm:$0xff]
    %v171 = vld [vmem:[#allocation8 + $0x68] sm:$0xff]
    %v172 = vld [vmem:[#allocation8 + $0x70] sm:$0xff]
    %v173 = vld [vmem:[#allocation8 + $0x78] sm:$0xff]
    %v174 = vld [vmem:[%s6] sm:$0x1]
    %v176 = vperm.slane %v174, 0
    %178 = vmatpush.msra.mxu0 %v173
    %179 = vmatpush.msra.mxu0 %v172
    %180 = vmatpush.msra.mxu0 %v171
    %181 = vmatpush.msra.mxu0 %v170
    %182 = vmatpush.msra.mxu0 %v169
    %183 = vmatpush.msra.mxu0 %v168
    %184 = vmatpush.msra.mxu0 %v167
    %185 = vmatpush.msra.mxu0 %v166
    %186 = vmatpush.msra.mxu0 %v165
    %187 = vmatpush.msra.mxu0 %v164
    %188 = vmatpush.msra.mxu0 %v163
    %189 = vmatpush.msra.mxu0 %v162
    %190 = vmatpush.msra.mxu0 %v161
    %191 = vmatpush.msra.mxu0 %v160
    %192 = vmatpush.msra.mxu0 %v159
    %193 = vmatpush.msra.mxu0 %v158
    %194 = vmatmul.f32.gmra.mxu0 %v157
    %v195 = vpop.f32.mrf.mxu0
    %v196 = vadd.f32 %v176, %v195
    %197 = vdwg.mxu0
    %198 = vst [vmem:[#allocation10] sm:$0x3] %v196
    // Predicated region
    $region46: #{tpu_custom_call.1} parent=1 // pred_check
      _
    $region47: #{tpu_custom_call.1} parent=1 // pred_check_branch
      %200 = sbr.rel (0) target = $region49
    $region48: #{tpu_custom_call.1} parent=1 // pred_region
      %202 = vsyncadd [#allocation4], 0
      %s204 = sshll.u32 [#allocation10], 4
      %s205 = int_to_ptr.vmem [resolvable:$true] %s204
      %s206 = sshll.u32 %s7, 4
      %s207 = int_to_ptr.hbm [resolvable:$true] %s206
      %209 = dma.vmem_to_hbm [thread:$0]  %s205, 32, %s207, [#allocation4]
    $region49: #{tpu_custom_call.1} parent=1 // pred_fallthru
      _
    // Predicated region
    $region50: #{tpu_custom_call.1} parent=1 // pred_check
      _
    $region51: #{tpu_custom_call.1} parent=1 // pred_check_branch
      %211 = sbr.rel (0) target = $region53
    $region52: #{tpu_custom_call.1} parent=1 // pred_region
      %213 = dma.done [#allocation4], 32
    $region53: #{tpu_custom_call.1} parent=1 // pred_fallthru
      _
    %214 = vsyncpa [#allocation3], 1
    %215 = vsyncpa [#allocation6], 1
    %216 = vsyncpa [#allocation9], 1
    %217 = vsyncpa [#allocation4], 1

</llo_original>
